<compile_context>
chip_gen: v6e
topology: v6e:2x2x1
jax: 0.10.0
libtpu: 0.0.40
codegen_flags: <defaults>
</compile_context>

<pallas_src>
import functools

import jax
import jax.numpy as jnp
from jax.experimental import pallas as pl
from jax.experimental.pallas import tpu as pltpu

LANE = 128


def _round_up(v, m):
    return (v + m - 1) // m * m


# ----------------------------------------------------------------------------
# Fused AutoEncoder kernel: one grid step processes a (tile_m, *) batch slab
# through every layer.  refs = (x, w0, b0, ..., w_{L-1}, b_{L-1}, enc, dec).
# ----------------------------------------------------------------------------
def _fused_ae_kernel(*refs, n_enc, n_layers):
    x_ref = refs[0]
    wb_refs = refs[1:1 + 2 * n_layers]
    enc_ref = refs[1 + 2 * n_layers]
    dec_ref = refs[2 + 2 * n_layers]

    h = x_ref[...].astype(jnp.float32)           # (tile_m, Kp0), lane-dense
    for l in range(n_layers):                    # static unroll over layers
        w = wb_refs[2 * l][...]                  # (Kp_l, Np_l)
        b = wb_refs[2 * l + 1][...]              # (1,    Np_l)
        h = jnp.dot(h, w, preferred_element_type=jnp.float32) + b
        if l < n_layers - 1:                     # all but the final decoder
            h = jnp.maximum(h, 0.0)              # layer have ReLU
        if l == n_enc - 1:                       # end of encoder -> emit
            enc_ref[...] = h.astype(enc_ref.dtype)
    dec_ref[...] = h.astype(dec_ref.dtype)


# ----------------------------------------------------------------------------
# Wrapper: pad, build specs, single pallas_call, slice padding off.
# ----------------------------------------------------------------------------
def autoencoder_forward(x, enc_params, dec_params, *, tile_m=None):
    layers = list(enc_params) + list(dec_params)
    n_enc = len(enc_params)
    n_layers = len(layers)
    M, K0 = x.shape

    in_dims = [w.shape[0] for w, _ in layers]
    out_dims = [w.shape[1] for w, _ in layers]
    pad_in = [_round_up(d, LANE) for d in in_dims]
    pad_out = [_round_up(d, LANE) for d in out_dims]
    assert in_dims[0] == K0

    # Batch tile: full (8-rounded) batch for small demos; cap at 512 rows so
    # realistic batches still get a multi-step "parallel" grid (v7x 2 TCs).
    if tile_m is None:
        tile_m = min(_round_up(M, 8), 512)
    assert tile_m % 8 == 0
    M_pad = _round_up(M, tile_m)

    # Zero-pad input to (M_pad, pad_in[0]) — lane-dense activation slab.
    x_pad = jnp.zeros((M_pad, pad_in[0]), x.dtype).at[:M, :K0].set(x)

    padded_inputs = [x_pad]
    in_specs = [pl.BlockSpec((tile_m, pad_in[0]), lambda i: (i, 0))]
    for l, (w, b) in enumerate(layers):
        wp = (jnp.zeros((pad_in[l], pad_out[l]), jnp.float32)
              .at[:w.shape[0], :w.shape[1]].set(w))
        bp = (jnp.zeros((1, pad_out[l]), jnp.float32)
              .at[0, :b.shape[0]].set(b))
        padded_inputs += [wp, bp]
        # Full-shape, constant-index blocks: DMA'd once, VMEM-resident.
        in_specs += [
            pl.BlockSpec((pad_in[l], pad_out[l]), lambda i: (0, 0)),
            pl.BlockSpec((1, pad_out[l]), lambda i: (0, 0)),
        ]

    enc_pad_dim = pad_out[n_enc - 1]
    dec_pad_dim = pad_out[-1]
    out_shape = (
        jax.ShapeDtypeStruct((M_pad, enc_pad_dim), x.dtype),
        jax.ShapeDtypeStruct((M_pad, dec_pad_dim), x.dtype),
    )
    out_specs = (
        pl.BlockSpec((tile_m, enc_pad_dim), lambda i: (i, 0)),
        pl.BlockSpec((tile_m, dec_pad_dim), lambda i: (i, 0)),
    )

    kernel = functools.partial(_fused_ae_kernel, n_enc=n_enc, n_layers=n_layers)

    enc_pad, dec_pad = pl.pallas_call(
        kernel,
        out_shape=out_shape,
        grid_spec=pl.GridSpec(
            grid=(M_pad // tile_m,),
            in_specs=in_specs,
            out_specs=out_specs,
        ),
        compiler_params=pltpu.CompilerParams(
            dimension_semantics=("parallel",),
            vmem_limit_bytes=64 << 20,
        ),
    )(*padded_inputs)

    encoded = enc_pad[:M, :out_dims[n_enc - 1]]
    decoded = dec_pad[:M, :out_dims[-1]]
    return encoded, decoded


# ----------------------------------------------------------------------------
# Deterministic synthetic parameters (weights stored transposed as (in, out)).
# ----------------------------------------------------------------------------
def init_autoencoder_params(key, input_num, hidden_list):
    enc_dims, d_in = [], input_num
    for h in hidden_list:
        enc_dims.append((d_in, h))
        d_in = h

    rev = hidden_list[::-1]
    dec_dims = [(rev[i], rev[i + 1]) for i in range(len(rev) - 1)]
    dec_dims.append((rev[-1], input_num))

    def make_layer(k, d_in, d_out):
        kw, kb = jax.random.split(k)
        scale = 1.0 / jnp.sqrt(d_in)
        w_t = jax.random.uniform(kw, (d_in, d_out), jnp.float32, -scale, scale)
        b = jax.random.uniform(kb, (d_out,), jnp.float32, -scale, scale)
        return w_t, b

    keys = jax.random.split(key, len(enc_dims) + len(dec_dims))
    enc = [make_layer(keys[i], *enc_dims[i]) for i in range(len(enc_dims))]
    dec = [make_layer(keys[len(enc_dims) + i], *dec_dims[i])
           for i in range(len(dec_dims))]
    return enc, dec


# ----------------------------------------------------------------------------
# Pure-JAX reference for correctness check.
# ----------------------------------------------------------------------------
def autoencoder_reference(x, enc_params, dec_params):
    h = x
    for w_t, b in enc_params:
        h = jnp.maximum(h @ w_t + b, 0.0)
    encoded = h
    h = encoded
    for w_t, b in dec_params[:-1]:
        h = jnp.maximum(h @ w_t + b, 0.0)
    w_t, b = dec_params[-1]
    decoded = h @ w_t + b
    return encoded, decoded


if __name__ == "__main__":
    key = jax.random.PRNGKey(0)
    k_x, k_p = jax.random.split(key)

    # small shapes consistent with the module: (batch, inputNum)
    batch, input_num = 16, 32
    hidden_list = [32, 16, 8]

    x = jax.random.normal(k_x, (batch, input_num), jnp.float32)
    enc_params, dec_params = init_autoencoder_params(k_p, input_num, hidden_list)

    encoded, decoded = autoencoder_forward(x, enc_params, dec_params)
    encoded, decoded = jax.block_until_ready((encoded, decoded))

    enc_ref, dec_ref = autoencoder_reference(x, enc_params, dec_params)
    assert encoded.shape == (batch, hidden_list[-1])
    assert decoded.shape == (batch, input_num)
    assert jnp.allclose(encoded, enc_ref, atol=1e-5, rtol=1e-5)
    assert jnp.allclose(decoded, dec_ref, atol=1e-5, rtol=1e-5)

    print("KERNEL_OK")
</pallas_src>

<mosaic_0001>
module attributes {stable_mosaic.version = 11 : i64} {
  func.func @_fused_ae_kernel(%arg0: i32, %arg1: memref<16x128xf32, #tpu.memory_space<vmem>>, %arg2: memref<128x128xf32, #tpu.memory_space<vmem>>, %arg3: memref<1x128xf32, #tpu.memory_space<vmem>>, %arg4: memref<128x128xf32, #tpu.memory_space<vmem>>, %arg5: memref<1x128xf32, #tpu.memory_space<vmem>>, %arg6: memref<128x128xf32, #tpu.memory_space<vmem>>, %arg7: memref<1x128xf32, #tpu.memory_space<vmem>>, %arg8: memref<128x128xf32, #tpu.memory_space<vmem>>, %arg9: memref<1x128xf32, #tpu.memory_space<vmem>>, %arg10: memref<128x128xf32, #tpu.memory_space<vmem>>, %arg11: memref<1x128xf32, #tpu.memory_space<vmem>>, %arg12: memref<128x128xf32, #tpu.memory_space<vmem>>, %arg13: memref<1x128xf32, #tpu.memory_space<vmem>>, %arg14: memref<16x128xf32, #tpu.memory_space<vmem>>, %arg15: memref<16x128xf32, #tpu.memory_space<vmem>>) attributes {dimension_semantics = [#tpu.dimension_semantics<parallel>], iteration_bounds = array<i64: 1>, scalar_prefetch = 0 : i64, scratch_operands = 0 : i64, tpu.core_type = #tpu.core_type<tc>, window_params = [{transform_indices = @transform_0, window_bounds = array<i64: 16, 128>}, {pipeline_mode = #tpu.pipeline_mode<synchronous>, transform_indices = @transform_1, window_bounds = array<i64: 128, 128>}, {pipeline_mode = #tpu.pipeline_mode<synchronous>, transform_indices = @transform_2, window_bounds = array<i64: 1, 128>}, {pipeline_mode = #tpu.pipeline_mode<synchronous>, transform_indices = @transform_3, window_bounds = array<i64: 128, 128>}, {pipeline_mode = #tpu.pipeline_mode<synchronous>, transform_indices = @transform_4, window_bounds = array<i64: 1, 128>}, {pipeline_mode = #tpu.pipeline_mode<synchronous>, transform_indices = @transform_5, window_bounds = array<i64: 128, 128>}, {pipeline_mode = #tpu.pipeline_mode<synchronous>, transform_indices = @transform_6, window_bounds = array<i64: 1, 128>}, {pipeline_mode = #tpu.pipeline_mode<synchronous>, transform_indices = @transform_7, window_bounds = array<i64: 128, 128>}, {pipeline_mode = #tpu.pipeline_mode<synchronous>, transform_indices = @transform_8, window_bounds = array<i64: 1, 128>}, {pipeline_mode = #tpu.pipeline_mode<synchronous>, transform_indices = @transform_9, window_bounds = array<i64: 128, 128>}, {pipeline_mode = #tpu.pipeline_mode<synchronous>, transform_indices = @transform_10, window_bounds = array<i64: 1, 128>}, {pipeline_mode = #tpu.pipeline_mode<synchronous>, transform_indices = @transform_11, window_bounds = array<i64: 128, 128>}, {pipeline_mode = #tpu.pipeline_mode<synchronous>, transform_indices = @transform_12, window_bounds = array<i64: 1, 128>}, {transform_indices = @transform_13, window_bounds = array<i64: 16, 128>}, {transform_indices = @transform_14, window_bounds = array<i64: 16, 128>}]} {
    %c0 = arith.constant 0 : index
    %c0_0 = arith.constant 0 : index
    %0 = vector.load %arg1[%c0, %c0_0] : memref<16x128xf32, #tpu.memory_space<vmem>>, vector<16x128xf32>
    %c0_1 = arith.constant 0 : index
    %c0_2 = arith.constant 0 : index
    %1 = vector.load %arg2[%c0_1, %c0_2] : memref<128x128xf32, #tpu.memory_space<vmem>>, vector<128x128xf32>
    %c0_3 = arith.constant 0 : index
    %c0_4 = arith.constant 0 : index
    %2 = vector.load %arg3[%c0_3, %c0_4] : memref<1x128xf32, #tpu.memory_space<vmem>>, vector<1x128xf32>
    %cst = arith.constant dense<0.000000e+00> : vector<16x128xf32>
    %3 = tpu.matmul %0, %1, %cst {dimension_numbers = #tpu.dot_dimension_numbers<[1], [0], [0], [1], [0, 0, 1, 1], [], []>} : vector<16x128xf32>, vector<128x128xf32>, vector<16x128xf32> -> vector<16x128xf32>
    %4 = vector.broadcast %2 : vector<1x128xf32> to vector<16x128xf32>
    %5 = arith.addf %3, %4 : vector<16x128xf32>
    %cst_5 = arith.constant 0.000000e+00 : f32
    %6 = vector.broadcast %cst_5 : f32 to vector<16x128xf32>
    %7 = arith.maximumf %5, %6 : vector<16x128xf32>
    %c0_6 = arith.constant 0 : index
    %c0_7 = arith.constant 0 : index
    %8 = vector.load %arg4[%c0_6, %c0_7] : memref<128x128xf32, #tpu.memory_space<vmem>>, vector<128x128xf32>
    %c0_8 = arith.constant 0 : index
    %c0_9 = arith.constant 0 : index
    %9 = vector.load %arg5[%c0_8, %c0_9] : memref<1x128xf32, #tpu.memory_space<vmem>>, vector<1x128xf32>
    %cst_10 = arith.constant dense<0.000000e+00> : vector<16x128xf32>
    %10 = tpu.matmul %7, %8, %cst_10 {dimension_numbers = #tpu.dot_dimension_numbers<[1], [0], [0], [1], [0, 0, 1, 1], [], []>} : vector<16x128xf32>, vector<128x128xf32>, vector<16x128xf32> -> vector<16x128xf32>
    %11 = vector.broadcast %9 : vector<1x128xf32> to vector<16x128xf32>
    %12 = arith.addf %10, %11 : vector<16x128xf32>
    %cst_11 = arith.constant 0.000000e+00 : f32
    %13 = vector.broadcast %cst_11 : f32 to vector<16x128xf32>
    %14 = arith.maximumf %12, %13 : vector<16x128xf32>
    %c0_12 = arith.constant 0 : index
    %c0_13 = arith.constant 0 : index
    %15 = vector.load %arg6[%c0_12, %c0_13] : memref<128x128xf32, #tpu.memory_space<vmem>>, vector<128x128xf32>
    %c0_14 = arith.constant 0 : index
    %c0_15 = arith.constant 0 : index
    %16 = vector.load %arg7[%c0_14, %c0_15] : memref<1x128xf32, #tpu.memory_space<vmem>>, vector<1x128xf32>
    %cst_16 = arith.constant dense<0.000000e+00> : vector<16x128xf32>
    %17 = tpu.matmul %14, %15, %cst_16 {dimension_numbers = #tpu.dot_dimension_numbers<[1], [0], [0], [1], [0, 0, 1, 1], [], []>} : vector<16x128xf32>, vector<128x128xf32>, vector<16x128xf32> -> vector<16x128xf32>
    %18 = vector.broadcast %16 : vector<1x128xf32> to vector<16x128xf32>
    %19 = arith.addf %17, %18 : vector<16x128xf32>
    %cst_17 = arith.constant 0.000000e+00 : f32
    %20 = vector.broadcast %cst_17 : f32 to vector<16x128xf32>
    %21 = arith.maximumf %19, %20 : vector<16x128xf32>
    %c0_18 = arith.constant 0 : index
    %c0_19 = arith.constant 0 : index
    %22 = vector.load %arg14[%c0_18, %c0_19] : memref<16x128xf32, #tpu.memory_space<vmem>>, vector<16x128xf32>
    tpu.vector_store %arg14[%c0_18, %c0_19], %21 {strides = array<i32>} : memref<16x128xf32, #tpu.memory_space<vmem>>, vector<16x128xf32>,
    %c0_20 = arith.constant 0 : index
    %c0_21 = arith.constant 0 : index
    %23 = vector.load %arg8[%c0_20, %c0_21] : memref<128x128xf32, #tpu.memory_space<vmem>>, vector<128x128xf32>
    %c0_22 = arith.constant 0 : index
    %c0_23 = arith.constant 0 : index
    %24 = vector.load %arg9[%c0_22, %c0_23] : memref<1x128xf32, #tpu.memory_space<vmem>>, vector<1x128xf32>
    %cst_24 = arith.constant dense<0.000000e+00> : vector<16x128xf32>
    %25 = tpu.matmul %21, %23, %cst_24 {dimension_numbers = #tpu.dot_dimension_numbers<[1], [0], [0], [1], [0, 0, 1, 1], [], []>} : vector<16x128xf32>, vector<128x128xf32>, vector<16x128xf32> -> vector<16x128xf32>
    %26 = vector.broadcast %24 : vector<1x128xf32> to vector<16x128xf32>
    %27 = arith.addf %25, %26 : vector<16x128xf32>
    %cst_25 = arith.constant 0.000000e+00 : f32
    %28 = vector.broadcast %cst_25 : f32 to vector<16x128xf32>
    %29 = arith.maximumf %27, %28 : vector<16x128xf32>
    %c0_26 = arith.constant 0 : index
    %c0_27 = arith.constant 0 : index
    %30 = vector.load %arg10[%c0_26, %c0_27] : memref<128x128xf32, #tpu.memory_space<vmem>>, vector<128x128xf32>
    %c0_28 = arith.constant 0 : index
    %c0_29 = arith.constant 0 : index
    %31 = vector.load %arg11[%c0_28, %c0_29] : memref<1x128xf32, #tpu.memory_space<vmem>>, vector<1x128xf32>
    %cst_30 = arith.constant dense<0.000000e+00> : vector<16x128xf32>
    %32 = tpu.matmul %29, %30, %cst_30 {dimension_numbers = #tpu.dot_dimension_numbers<[1], [0], [0], [1], [0, 0, 1, 1], [], []>} : vector<16x128xf32>, vector<128x128xf32>, vector<16x128xf32> -> vector<16x128xf32>
    %33 = vector.broadcast %31 : vector<1x128xf32> to vector<16x128xf32>
    %34 = arith.addf %32, %33 : vector<16x128xf32>
    %cst_31 = arith.constant 0.000000e+00 : f32
    %35 = vector.broadcast %cst_31 : f32 to vector<16x128xf32>
    %36 = arith.maximumf %34, %35 : vector<16x128xf32>
    %c0_32 = arith.constant 0 : index
    %c0_33 = arith.constant 0 : index
    %37 = vector.load %arg12[%c0_32, %c0_33] : memref<128x128xf32, #tpu.memory_space<vmem>>, vector<128x128xf32>
    %c0_34 = arith.constant 0 : index
    %c0_35 = arith.constant 0 : index
    %38 = vector.load %arg13[%c0_34, %c0_35] : memref<1x128xf32, #tpu.memory_space<vmem>>, vector<1x128xf32>
    %cst_36 = arith.constant dense<0.000000e+00> : vector<16x128xf32>
    %39 = tpu.matmul %36, %37, %cst_36 {dimension_numbers = #tpu.dot_dimension_numbers<[1], [0], [0], [1], [0, 0, 1, 1], [], []>} : vector<16x128xf32>, vector<128x128xf32>, vector<16x128xf32> -> vector<16x128xf32>
    %40 = vector.broadcast %38 : vector<1x128xf32> to vector<16x128xf32>
    %41 = arith.addf %39, %40 : vector<16x128xf32>
    %c0_37 = arith.constant 0 : index
    %c0_38 = arith.constant 0 : index
    %42 = vector.load %arg15[%c0_37, %c0_38] : memref<16x128xf32, #tpu.memory_space<vmem>>, vector<16x128xf32>
    tpu.vector_store %arg15[%c0_37, %c0_38], %41 {strides = array<i32>} : memref<16x128xf32, #tpu.memory_space<vmem>>, vector<16x128xf32>,
    return
  }
  func.func @transform_0(%arg0: i32) -> (i32, i32) {
    %c0_i32 = arith.constant 0 : i32
    %c0_i32_0 = arith.constant 0 : i32
    return %arg0, %c0_i32 : i32, i32
  }
  func.func @transform_1(%arg0: i32) -> (i32, i32) {
    %c0_i32 = arith.constant 0 : i32
    %c0_i32_0 = arith.constant 0 : i32
    %c0_i32_1 = arith.constant 0 : i32
    return %c0_i32, %c0_i32_0 : i32, i32
  }
  func.func @transform_2(%arg0: i32) -> (i32, i32) {
    %c0_i32 = arith.constant 0 : i32
    %c0_i32_0 = arith.constant 0 : i32
    %c0_i32_1 = arith.constant 0 : i32
    return %c0_i32, %c0_i32_0 : i32, i32
  }
  func.func @transform_3(%arg0: i32) -> (i32, i32) {
    %c0_i32 = arith.constant 0 : i32
    %c0_i32_0 = arith.constant 0 : i32
    %c0_i32_1 = arith.constant 0 : i32
    return %c0_i32, %c0_i32_0 : i32, i32
  }
  func.func @transform_4(%arg0: i32) -> (i32, i32) {
    %c0_i32 = arith.constant 0 : i32
    %c0_i32_0 = arith.constant 0 : i32
    %c0_i32_1 = arith.constant 0 : i32
    return %c0_i32, %c0_i32_0 : i32, i32
  }
  func.func @transform_5(%arg0: i32) -> (i32, i32) {
    %c0_i32 = arith.constant 0 : i32
    %c0_i32_0 = arith.constant 0 : i32
    %c0_i32_1 = arith.constant 0 : i32
    return %c0_i32, %c0_i32_0 : i32, i32
  }
  func.func @transform_6(%arg0: i32) -> (i32, i32) {
    %c0_i32 = arith.constant 0 : i32
    %c0_i32_0 = arith.constant 0 : i32
    %c0_i32_1 = arith.constant 0 : i32
    return %c0_i32, %c0_i32_0 : i32, i32
  }
  func.func @transform_7(%arg0: i32) -> (i32, i32) {
    %c0_i32 = arith.constant 0 : i32
    %c0_i32_0 = arith.constant 0 : i32
    %c0_i32_1 = arith.constant 0 : i32
    return %c0_i32, %c0_i32_0 : i32, i32
  }
  func.func @transform_8(%arg0: i32) -> (i32, i32) {
    %c0_i32 = arith.constant 0 : i32
    %c0_i32_0 = arith.constant 0 : i32
    %c0_i32_1 = arith.constant 0 : i32
    return %c0_i32, %c0_i32_0 : i32, i32
  }
  func.func @transform_9(%arg0: i32) -> (i32, i32) {
    %c0_i32 = arith.constant 0 : i32
    %c0_i32_0 = arith.constant 0 : i32
    %c0_i32_1 = arith.constant 0 : i32
    return %c0_i32, %c0_i32_0 : i32, i32
  }
  func.func @transform_10(%arg0: i32) -> (i32, i32) {
    %c0_i32 = arith.constant 0 : i32
    %c0_i32_0 = arith.constant 0 : i32
    %c0_i32_1 = arith.constant 0 : i32
    return %c0_i32, %c0_i32_0 : i32, i32
  }
  func.func @transform_11(%arg0: i32) -> (i32, i32) {
    %c0_i32 = arith.constant 0 : i32
    %c0_i32_0 = arith.constant 0 : i32
    %c0_i32_1 = arith.constant 0 : i32
    return %c0_i32, %c0_i32_0 : i32, i32
  }
  func.func @transform_12(%arg0: i32) -> (i32, i32) {
    %c0_i32 = arith.constant 0 : i32
    %c0_i32_0 = arith.constant 0 : i32
    %c0_i32_1 = arith.constant 0 : i32
    return %c0_i32, %c0_i32_0 : i32, i32
  }
  func.func @transform_13(%arg0: i32) -> (i32, i32) {
    %c0_i32 = arith.constant 0 : i32
    %c0_i32_0 = arith.constant 0 : i32
    return %arg0, %c0_i32 : i32, i32
  }
  func.func @transform_14(%arg0: i32) -> (i32, i32) {
    %c0_i32 = arith.constant 0 : i32
    %c0_i32_0 = arith.constant 0 : i32
    return %arg0, %c0_i32 : i32, i32
  }
}

</mosaic_0001>

<llo_original>
// kernel: tpu_custom_call.1
$region0: #{tpu_custom_call.1}
  #allocation0 [shape = 'u32[]', space=smem, size = 0x4, offset = 0x4, fixed_abs, tag = 'smem constant byte address 0x4 - core index']
  #allocation1 [shape = 'u32[144,128]{1,0:T(1,128)}', space=vmem, size = 0x12000, scoped, tag = 'internal scratch']
  %s0 = inlined_call_operand.hbm [shape: f32[16,128], index: 0, kind: input, shape index: {}]
  %s1 = inlined_call_operand.hbm [shape: f32[128,128], index: 1, kind: input, shape index: {}]
  %s2 = inlined_call_operand.vmem [shape: f32[1,128], index: 2, kind: input, shape index: {}]
  %s3 = inlined_call_operand.hbm [shape: f32[128,128], index: 3, kind: input, shape index: {}]
  %s4 = inlined_call_operand.vmem [shape: f32[1,128], index: 4, kind: input, shape index: {}]
  %s5 = inlined_call_operand.hbm [shape: f32[128,128], index: 5, kind: input, shape index: {}]
  %s6 = inlined_call_operand.vmem [shape: f32[1,128], index: 6, kind: input, shape index: {}]
  %s7 = inlined_call_operand.hbm [shape: f32[128,128], index: 7, kind: input, shape index: {}]
  %s8 = inlined_call_operand.vmem [shape: f32[1,128], index: 8, kind: input, shape index: {}]
  %s9 = inlined_call_operand.hbm [shape: f32[128,128], index: 9, kind: input, shape index: {}]
  %s10 = inlined_call_operand.vmem [shape: f32[1,128], index: 10, kind: input, shape index: {}]
  %s11 = inlined_call_operand.hbm [shape: f32[128,128], index: 11, kind: input, shape index: {}]
  %s12 = inlined_call_operand.vmem [shape: f32[1,128], index: 12, kind: input, shape index: {}]
  %s13 = inlined_call_operand.hbm [shape: f32[16,128], index: 13, kind: output, shape index: {0}]
  %s14 = inlined_call_operand.hbm [shape: f32[16,128], index: 14, kind: output, shape index: {1}]
  %15 = xla_tuple %s13, %s14
  %s16 = sld [smem:[#allocation0]]
  $region98: #{tpu_custom_call.1} parent=0
    _
  %s18 = ssub.s32 1, %s16
  %s19 = scalar_select 0, %s18, %s16
  $region1: #{tpu_custom_call.1} parent=0
    #allocation2 [shape = 'u8[8192]{0}', space=vmem, size = 0x2000, scoped, tag = 'input window, operand 0, single buffered']
    #allocation3 [shape = 's32[1]{0}', space=sflag, size = 0x4, scoped, tag = 'scoped memory for tpu_custom_call.1']
    #allocation4 [shape = 's32[1]{0}', space=sflag, size = 0x4, scoped, tag = 'scoped memory for tpu_custom_call.1']
    #allocation5 [shape = 'u8[65536]{0}', space=vmem, size = 0x10000, scoped, tag = 'input window, operand 1, single buffered']
    #allocation6 [shape = 's32[1]{0}', space=sflag, size = 0x4, scoped, tag = 'scoped memory for tpu_custom_call.1']
    #allocation7 [shape = 'u8[65536]{0}', space=vmem, size = 0x10000, scoped, tag = 'input window, operand 3, single buffered']
    #allocation8 [shape = 'u8[65536]{0}', space=vmem, size = 0x10000, scoped, tag = 'input window, operand 5, single buffered']
    #allocation9 [shape = 's32[1]{0}', space=sflag, size = 0x4, scoped, tag = 'scoped memory for tpu_custom_call.1']
    #allocation10 [shape = 'u8[65536]{0}', space=vmem, size = 0x10000, scoped, tag = 'input window, operand 7, single buffered']
    #allocation11 [shape = 'u8[65536]{0}', space=vmem, size = 0x10000, scoped, tag = 'input window, operand 9, single buffered']
    #allocation12 [shape = 's32[1]{0}', space=sflag, size = 0x4, scoped, tag = 'scoped memory for tpu_custom_call.1']
    #allocation13 [shape = 'u8[65536]{0}', space=vmem, size = 0x10000, scoped, tag = 'input window, operand 11, single buffered']
    #allocation14 [shape = 'u8[8192]{0}', space=vmem, size = 0x2000, scoped, tag = 'output window, operand 0, single buffered']
    #allocation15 [shape = 'u8[8192]{0}', space=vmem, size = 0x2000, scoped, tag = 'output window, operand 1, single buffered']
    #allocation16 [shape = 's32[1]{0}', space=sflag, size = 0x4, scoped, tag = 'scoped memory for tpu_custom_call.1']
    %20 = vsyncpa [#allocation3], 0
    %21 = vsyncpa [#allocation6], 0
    %22 = vsyncpa [#allocation9], 0
    %23 = vsyncpa [#allocation12], 0
    %24 = vsyncpa [#allocation4], 0
    %25 = vsyncpa [#allocation16], 0
    // Predicated region
    $region2: #{tpu_custom_call.1} parent=1 // pred_check
      _
    $region3: #{tpu_custom_call.1} parent=1 // pred_check_branch
      %27 = sbr.rel (0) target = $region5
    $region4: #{tpu_custom_call.1} parent=1 // pred_region
      %s29 = ssub.s32 256, 256
      %30 = vsyncadd [#allocation3], %s29
      %s31 = sshll.u32 [#allocation2], 4
      %s32 = int_to_ptr.vmem [resolvable:$true] %s31
      %37 = dma.hbm_to_vmem [thread:$0]  %s0, 256, %s32, [#allocation3], 128, 128, 8
    $region5: #{tpu_custom_call.1} parent=1 // pred_fallthru
      _
    // Predicated region
    $region6: #{tpu_custom_call.1} parent=1 // pred_check
      _
    $region7: #{tpu_custom_call.1} parent=1 // pred_check_branch
      %39 = sbr.rel (0) target = $region9
    $region8: #{tpu_custom_call.1} parent=1 // pred_region
      %s41 = ssub.s32 2048, 2048
      %42 = vsyncadd [#allocation6], %s41
      %s43 = sshll.u32 [#allocation5], 4
      %s44 = int_to_ptr.vmem [resolvable:$true] %s43
      %49 = dma.hbm_to_vmem [thread:$0]  %s1, 2048, %s44, [#allocation6], 128, 128, 8
    $region9: #{tpu_custom_call.1} parent=1 // pred_fallthru
      _
    // Predicated region
    $region10: #{tpu_custom_call.1} parent=1 // pred_check
      _
    $region11: #{tpu_custom_call.1} parent=1 // pred_check_branch
      %51 = sbr.rel (0) target = $region13
    $region12: #{tpu_custom_call.1} parent=1 // pred_region
      _
    $region13: #{tpu_custom_call.1} parent=1 // pred_fallthru
      _
    // Predicated region
    $region14: #{tpu_custom_call.1} parent=1 // pred_check
      _
    $region15: #{tpu_custom_call.1} parent=1 // pred_check_branch
      %53 = sbr.rel (0) target = $region17
    $region16: #{tpu_custom_call.1} parent=1 // pred_region
      %s55 = ssub.s32 2048, 2048
      %56 = vsyncadd [#allocation6], %s55
      %s57 = sshll.u32 [#allocation7], 4
      %s58 = int_to_ptr.vmem [resolvable:$true] %s57
      %63 = dma.hbm_to_vmem [thread:$0]  %s3, 2048, %s58, [#allocation6], 128, 128, 8
    $region17: #{tpu_custom_call.1} parent=1 // pred_fallthru
      _
    // Predicated region
    $region18: #{tpu_custom_call.1} parent=1 // pred_check
      _
    $region19: #{tpu_custom_call.1} parent=1 // pred_check_branch
      %65 = sbr.rel (0) target = $region21
    $region20: #{tpu_custom_call.1} parent=1 // pred_region
      _
    $region21: #{tpu_custom_call.1} parent=1 // pred_fallthru
      _
    // Predicated region
    $region22: #{tpu_custom_call.1} parent=1 // pred_check
      _
    $region23: #{tpu_custom_call.1} parent=1 // pred_check_branch
      %67 = sbr.rel (0) target = $region25
    $region24: #{tpu_custom_call.1} parent=1 // pred_region
      %s69 = ssub.s32 2048, 2048
      %70 = vsyncadd [#allocation9], %s69
      %s71 = sshll.u32 [#allocation8], 4
      %s72 = int_to_ptr.vmem [resolvable:$true] %s71
      %77 = dma.hbm_to_vmem [thread:$0]  %s5, 2048, %s72, [#allocation9], 128, 128, 8
    $region25: #{tpu_custom_call.1} parent=1 // pred_fallthru
      _
    // Predicated region
    $region26: #{tpu_custom_call.1} parent=1 // pred_check
      _
    $region27: #{tpu_custom_call.1} parent=1 // pred_check_branch
      %79 = sbr.rel (0) target = $region29
    $region28: #{tpu_custom_call.1} parent=1 // pred_region
      _
    $region29: #{tpu_custom_call.1} parent=1 // pred_fallthru
      _
    // Predicated region
    $region30: #{tpu_custom_call.1} parent=1 // pred_check
      _
    $region31: #{tpu_custom_call.1} parent=1 // pred_check_branch
      %81 = sbr.rel (0) target = $region33
    $region32: #{tpu_custom_call.1} parent=1 // pred_region
      %s83 = ssub.s32 2048, 2048
      %84 = vsyncadd [#allocation9], %s83
      %s85 = sshll.u32 [#allocation10], 4
      %s86 = int_to_ptr.vmem [resolvable:$true] %s85
      %91 = dma.hbm_to_vmem [thread:$0]  %s7, 2048, %s86, [#allocation9], 128, 128, 8
    $region33: #{tpu_custom_call.1} parent=1 // pred_fallthru
      _
    // Predicated region
    $region34: #{tpu_custom_call.1} parent=1 // pred_check
      _
    $region35: #{tpu_custom_call.1} parent=1 // pred_check_branch
      %93 = sbr.rel (0) target = $region37
    $region36: #{tpu_custom_call.1} parent=1 // pred_region
      _
    $region37: #{tpu_custom_call.1} parent=1 // pred_fallthru
      _
    // Predicated region
    $region38: #{tpu_custom_call.1} parent=1 // pred_check
      _
    $region39: #{tpu_custom_call.1} parent=1 // pred_check_branch
      %95 = sbr.rel (0) target = $region41
    $region40: #{tpu_custom_call.1} parent=1 // pred_region
      %s97 = ssub.s32 2048, 2048
      %98 = vsyncadd [#allocation12], %s97
      %s99 = sshll.u32 [#allocation11], 4
      %s100 = int_to_ptr.vmem [resolvable:$true] %s99
      %105 = dma.hbm_to_vmem [thread:$0]  %s9, 2048, %s100, [#allocation12], 128, 128, 8
    $region41: #{tpu_custom_call.1} parent=1 // pred_fallthru
      _
    // Predicated region
    $region42: #{tpu_custom_call.1} parent=1 // pred_check
      _
    $region43: #{tpu_custom_call.1} parent=1 // pred_check_branch
      %107 = sbr.rel (0) target = $region45
    $region44: #{tpu_custom_call.1} parent=1 // pred_region
      _
    $region45: #{tpu_custom_call.1} parent=1 // pred_fallthru
      _
    // Predicated region
    $region46: #{tpu_custom_call.1} parent=1 // pred_check
      _
    $region47: #{tpu_custom_call.1} parent=1 // pred_check_branch
      %109 = sbr.rel (0) target = $region49
    $region48: #{tpu_custom_call.1} parent=1 // pred_region
      %s111 = ssub.s32 2048, 2048
      %112 = vsyncadd [#allocation12], %s111
      %s113 = sshll.u32 [#allocation13], 4
      %s114 = int_to_ptr.vmem [resolvable:$true] %s113
      %119 = dma.hbm_to_vmem [thread:$0]  %s11, 2048, %s114, [#allocation12], 128, 128, 8
    $region49: #{tpu_custom_call.1} parent=1 // pred_fallthru
      _
    // Predicated region
    $region50: #{tpu_custom_call.1} parent=1 // pred_check
      _
    $region51: #{tpu_custom_call.1} parent=1 // pred_check_branch
      %121 = sbr.rel (0) target = $region53
    $region52: #{tpu_custom_call.1} parent=1 // pred_region
      _
    $region53: #{tpu_custom_call.1} parent=1 // pred_fallthru
      _
    // Predicated region
    $region54: #{tpu_custom_call.1} parent=1 // pred_check
      _
    $region55: #{tpu_custom_call.1} parent=1 // pred_check_branch
      %123 = sbr.rel (0) target = $region57
    $region56: #{tpu_custom_call.1} parent=1 // pred_region
      %124 = dma.done [#allocation3], 256
    $region57: #{tpu_custom_call.1} parent=1 // pred_fallthru
      _
    // Predicated region
    $region58: #{tpu_custom_call.1} parent=1 // pred_check
      _
    $region59: #{tpu_custom_call.1} parent=1 // pred_check_branch
      %126 = sbr.rel (0) target = $region61
    $region60: #{tpu_custom_call.1} parent=1 // pred_region
      %127 = dma.done [#allocation6], 2048
    $region61: #{tpu_custom_call.1} parent=1 // pred_fallthru
      _
    // Predicated region
    $region62: #{tpu_custom_call.1} parent=1 // pred_check
      _
    $region63: #{tpu_custom_call.1} parent=1 // pred_check_branch
      %129 = sbr.rel (0) target = $region65
    $region64: #{tpu_custom_call.1} parent=1 // pred_region
      %130 = dma.done [#allocation6], 2048
    $region65: #{tpu_custom_call.1} parent=1 // pred_fallthru
      _
    // Predicated region
    $region66: #{tpu_custom_call.1} parent=1 // pred_check
      _
    $region67: #{tpu_custom_call.1} parent=1 // pred_check_branch
      %132 = sbr.rel (0) target = $region69
    $region68: #{tpu_custom_call.1} parent=1 // pred_region
      %133 = dma.done [#allocation9], 2048
    $region69: #{tpu_custom_call.1} parent=1 // pred_fallthru
      _
    // Predicated region
    $region70: #{tpu_custom_call.1} parent=1 // pred_check
      _
    $region71: #{tpu_custom_call.1} parent=1 // pred_check_branch
      %135 = sbr.rel (0) target = $region73
    $region72: #{tpu_custom_call.1} parent=1 // pred_region
      %136 = dma.done [#allocation9], 2048
    $region73: #{tpu_custom_call.1} parent=1 // pred_fallthru
      _
    // Predicated region
    $region74: #{tpu_custom_call.1} parent=1 // pred_check
      _
    $region75: #{tpu_custom_call.1} parent=1 // pred_check_branch
      %138 = sbr.rel (0) target = $region77
    $region76: #{tpu_custom_call.1} parent=1 // pred_region
      %139 = dma.done [#allocation12], 2048
    $region77: #{tpu_custom_call.1} parent=1 // pred_fallthru
      _
    // Predicated region
    $region78: #{tpu_custom_call.1} parent=1 // pred_check
      _
    $region79: #{tpu_custom_call.1} parent=1 // pred_check_branch
      %141 = sbr.rel (0) target = $region81
    $region80: #{tpu_custom_call.1} parent=1 // pred_region
      %142 = dma.done [#allocation12], 2048
    $region81: #{tpu_custom_call.1} parent=1 // pred_fallthru
      _
    %v143 = vld [vmem:[#allocation2] sm:$0xff]
    %v144 = vld [vmem:[#allocation2 + $0x8] sm:$0xff]
    %v145 = vld [vmem:[#allocation5] sm:$0xff]
    %v146 = vld [vmem:[#allocation5 + $0x8] sm:$0xff]
    %v147 = vld [vmem:[#allocation5 + $0x10] sm:$0xff]
    %v148 = vld [vmem:[#allocation5 + $0x18] sm:$0xff]
    %v149 = vld [vmem:[#allocation5 + $0x20] sm:$0xff]
    %v150 = vld [vmem:[#allocation5 + $0x28] sm:$0xff]
    %v151 = vld [vmem:[#allocation5 + $0x30] sm:$0xff]
    %v152 = vld [vmem:[#allocation5 + $0x38] sm:$0xff]
    %v153 = vld [vmem:[#allocation5 + $0x40] sm:$0xff]
    %v154 = vld [vmem:[#allocation5 + $0x48] sm:$0xff]
    %v155 = vld [vmem:[#allocation5 + $0x50] sm:$0xff]
    %v156 = vld [vmem:[#allocation5 + $0x58] sm:$0xff]
    %v157 = vld [vmem:[#allocation5 + $0x60] sm:$0xff]
    %v158 = vld [vmem:[#allocation5 + $0x68] sm:$0xff]
    %v159 = vld [vmem:[#allocation5 + $0x70] sm:$0xff]
    %v160 = vld [vmem:[#allocation5 + $0x78] sm:$0xff]
    %v161 = vld [vmem:[%s2] sm:$0x1]
    %v163 = vlaneseq
    %v164 = vshrl.u32 %v163, 7
    %v165 = vsub.s32 0, %v164
    %v166 = vrot.slane %v161, %v165
    %168 = vmatprep.subr.mxu0 0.0
    %169 = vmatpush1.msra.mxu0 %v160
    %170 = vmatprep.subr.mxu0 0.0
    %171 = vmatpush1.msra.mxu0 %v159
    %172 = vmatprep.subr.mxu0 0.0
    %173 = vmatpush1.msra.mxu0 %v158
    %174 = vmatprep.subr.mxu0 0.0
    %175 = vmatpush1.msra.mxu0 %v157
    %176 = vmatprep.subr.mxu0 0.0
    %177 = vmatpush1.msra.mxu0 %v156
    %178 = vmatprep.subr.mxu0 0.0
    %179 = vmatpush1.msra.mxu0 %v155
    %180 = vmatprep.subr.mxu0 0.0
    %181 = vmatpush1.msra.mxu0 %v154
    %182 = vmatprep.subr.mxu0 0.0
    %183 = vmatpush1.msra.mxu0 %v153
    %184 = vmatprep.subr.mxu0 0.0
    %185 = vmatpush1.msra.mxu0 %v152
    %186 = vmatprep.subr.mxu0 0.0
    %187 = vmatpush1.msra.mxu0 %v151
    %188 = vmatprep.subr.mxu0 0.0
    %189 = vmatpush1.msra.mxu0 %v150
    %190 = vmatprep.subr.mxu0 0.0
    %191 = vmatpush1.msra.mxu0 %v149
    %192 = vmatprep.subr.mxu0 0.0
    %193 = vmatpush1.msra.mxu0 %v148
    %194 = vmatprep.subr.mxu0 0.0
    %195 = vmatpush1.msra.mxu0 %v147
    %196 = vmatprep.subr.mxu0 0.0
    %197 = vmatpush1.msra.mxu0 %v146
    %198 = vmatprep.subr.mxu0 0.0
    %199 = vmatpush1.msra.mxu0 %v145
    %200 = vmatprep.subr.mxu0 0.0
    %201 = vmatpush2.msra.mxu0 0.0
    %202 = vmatprep.subr.mxu0 0.0
    %203 = vmatpush2.msra.mxu0 0.0
    %204 = vmatprep.subr.mxu0 0.0
    %205 = vmatpush2.msra.mxu0 0.0
    %206 = vmatprep.subr.mxu0 0.0
    %207 = vmatpush2.msra.mxu0 0.0
    %208 = vmatprep.subr.mxu0 0.0
    %209 = vmatpush2.msra.mxu0 0.0
    %210 = vmatprep.subr.mxu0 0.0
    %211 = vmatpush2.msra.mxu0 0.0
    %212 = vmatprep.subr.mxu0 0.0
    %213 = vmatpush2.msra.mxu0 0.0
    %214 = vmatprep.subr.mxu0 0.0
    %215 = vmatpush2.msra.mxu0 0.0
    %216 = vmatprep.subr.mxu0 0.0
    %217 = vmatpush2.msra.mxu0 0.0
    %218 = vmatprep.subr.mxu0 0.0
    %219 = vmatpush2.msra.mxu0 0.0
    %220 = vmatprep.subr.mxu0 0.0
    %221 = vmatpush2.msra.mxu0 0.0
    %222 = vmatprep.subr.mxu0 0.0
    %223 = vmatpush2.msra.mxu0 0.0
    %224 = vmatprep.subr.mxu0 0.0
    %225 = vmatpush2.msra.mxu0 0.0
    %226 = vmatprep.subr.mxu0 0.0
    %227 = vmatpush2.msra.mxu0 0.0
    %228 = vmatprep.subr.mxu0 0.0
    %229 = vmatpush2.msra.mxu0 0.0
    %230 = vmatprep.subr.mxu0 0.0
    %231 = vmatpush2.msra.mxu0 0.0
    %232 = vmatprep.mubr.f32.mxu0 0.0
    %233 = vmatmul.mubr.f32.gmra.mxu0 %v143
    %v234 = vpop.f32.mrf.mxu0
    %v235 = vadd.f32 %v166, %v234
    %v236 = vpop.f32.mrf.mxu0
    %237 = vmatprep.mubr.f32.mxu0 0.0
    %238 = vmatmul.mubr.f32.gmra.mxu0 %v144
    %v239 = vpop.f32.mrf.mxu0
    %v240 = vadd.f32 %v166, %v239
    %v241 = vpop.f32.mrf.mxu0
    %242 = vdwg.mxu0
    %v243 = vmax.f32 %v235, 0.0
    %v244 = vmax.f32 %v240, 0.0
    %v245 = vld [vmem:[#allocation7] sm:$0xff]
    %v246 = vld [vmem:[#allocation7 + $0x8] sm:$0xff]
    %v247 = vld [vmem:[#allocation7 + $0x10] sm:$0xff]
    %v248 = vld [vmem:[#allocation7 + $0x18] sm:$0xff]
    %v249 = vld [vmem:[#allocation7 + $0x20] sm:$0xff]
    %v250 = vld [vmem:[#allocation7 + $0x28] sm:$0xff]
    %v251 = vld [vmem:[#allocation7 + $0x30] sm:$0xff]
    %v252 = vld [vmem:[#allocation7 + $0x38] sm:$0xff]
    %v253 = vld [vmem:[#allocation7 + $0x40] sm:$0xff]
    %v254 = vld [vmem:[#allocation7 + $0x48] sm:$0xff]
    %v255 = vld [vmem:[#allocation7 + $0x50] sm:$0xff]
    %v256 = vld [vmem:[#allocation7 + $0x58] sm:$0xff]
    %v257 = vld [vmem:[#allocation7 + $0x60] sm:$0xff]
    %v258 = vld [vmem:[#allocation7 + $0x68] sm:$0xff]
    %v259 = vld [vmem:[#allocation7 + $0x70] sm:$0xff]
    %v260 = vld [vmem:[#allocation7 + $0x78] sm:$0xff]
    %v261 = vld [vmem:[%s4] sm:$0x1]
    %v263 = vlaneseq
    %v264 = vshrl.u32 %v263, 7
    %v265 = vsub.s32 0, %v264
    %v266 = vrot.slane %v261, %v265
    %268 = vmatprep.subr.mxu0 0.0
    %269 = vmatpush1.msra.mxu0 %v260
    %270 = vmatprep.subr.mxu0 0.0
    %271 = vmatpush1.msra.mxu0 %v259
    %272 = vmatprep.subr.mxu0 0.0
    %273 = vmatpush1.msra.mxu0 %v258
    %274 = vmatprep.subr.mxu0 0.0
    %275 = vmatpush1.msra.mxu0 %v257
    %276 = vmatprep.subr.mxu0 0.0
    %277 = vmatpush1.msra.mxu0 %v256
    %278 = vmatprep.subr.mxu0 0.0
    %279 = vmatpush1.msra.mxu0 %v255
    %280 = vmatprep.subr.mxu0 0.0
    %281 = vmatpush1.msra.mxu0 %v254
    %282 = vmatprep.subr.mxu0 0.0
    %283 = vmatpush1.msra.mxu0 %v253
    %284 = vmatprep.subr.mxu0 0.0
    %285 = vmatpush1.msra.mxu0 %v252
    %286 = vmatprep.subr.mxu0 0.0
    %287 = vmatpush1.msra.mxu0 %v251
    %288 = vmatprep.subr.mxu0 0.0
    %289 = vmatpush1.msra.mxu0 %v250
    %290 = vmatprep.subr.mxu0 0.0
    %291 = vmatpush1.msra.mxu0 %v249
    %292 = vmatprep.subr.mxu0 0.0
    %293 = vmatpush1.msra.mxu0 %v248
    %294 = vmatprep.subr.mxu0 0.0
    %295 = vmatpush1.msra.mxu0 %v247
    %296 = vmatprep.subr.mxu0 0.0
    %297 = vmatpush1.msra.mxu0 %v246
    %298 = vmatprep.subr.mxu0 0.0
    %299 = vmatpush1.msra.mxu0 %v245
    %300 = vmatprep.subr.mxu0 0.0
    %301 = vmatpush2.msra.mxu0 0.0
    %302 = vmatprep.subr.mxu0 0.0
    %303 = vmatpush2.msra.mxu0 0.0
    %304 = vmatprep.subr.mxu0 0.0
    %305 = vmatpush2.msra.mxu0 0.0
    %306 = vmatprep.subr.mxu0 0.0
    %307 = vmatpush2.msra.mxu0 0.0
    %308 = vmatprep.subr.mxu0 0.0
    %309 = vmatpush2.msra.mxu0 0.0
    %310 = vmatprep.subr.mxu0 0.0
    %311 = vmatpush2.msra.mxu0 0.0
    %312 = vmatprep.subr.mxu0 0.0
    %313 = vmatpush2.msra.mxu0 0.0
    %314 = vmatprep.subr.mxu0 0.0
    %315 = vmatpush2.msra.mxu0 0.0
    %316 = vmatprep.subr.mxu0 0.0
    %317 = vmatpush2.msra.mxu0 0.0
    %318 = vmatprep.subr.mxu0 0.0
    %319 = vmatpush2.msra.mxu0 0.0
    %320 = vmatprep.subr.mxu0 0.0
    %321 = vmatpush2.msra.mxu0 0.0
    %322 = vmatprep.subr.mxu0 0.0
    %323 = vmatpush2.msra.mxu0 0.0
    %324 = vmatprep.subr.mxu0 0.0
    %325 = vmatpush2.msra.mxu0 0.0
    %326 = vmatprep.subr.mxu0 0.0
    %327 = vmatpush2.msra.mxu0 0.0
    %328 = vmatprep.subr.mxu0 0.0
    %329 = vmatpush2.msra.mxu0 0.0
    %330 = vmatprep.subr.mxu0 0.0
    %331 = vmatpush2.msra.mxu0 0.0
    %332 = vmatprep.mubr.f32.mxu0 0.0
    %333 = vmatmul.mubr.f32.gmra.mxu0 %v243
    %v334 = vpop.f32.mrf.mxu0
    %v335 = vadd.f32 %v266, %v334
    %v336 = vpop.f32.mrf.mxu0
    %337 = vmatprep.mubr.f32.mxu0 0.0
    %338 = vmatmul.mubr.f32.gmra.mxu0 %v244
    %v339 = vpop.f32.mrf.mxu0
    %v340 = vadd.f32 %v266, %v339
    %v341 = vpop.f32.mrf.mxu0
    %342 = vdwg.mxu0
    %v343 = vmax.f32 %v335, 0.0
    %v344 = vmax.f32 %v340, 0.0
    %v345 = vld [vmem:[#allocation8] sm:$0xff]
    %v346 = vld [vmem:[#allocation8 + $0x8] sm:$0xff]
    %v347 = vld [vmem:[#allocation8 + $0x10] sm:$0xff]
    %v348 = vld [vmem:[#allocation8 + $0x18] sm:$0xff]
    %v349 = vld [vmem:[#allocation8 + $0x20] sm:$0xff]
    %v350 = vld [vmem:[#allocation8 + $0x28] sm:$0xff]
    %v351 = vld [vmem:[#allocation8 + $0x30] sm:$0xff]
    %v352 = vld [vmem:[#allocation8 + $0x38] sm:$0xff]
    %v353 = vld [vmem:[#allocation8 + $0x40] sm:$0xff]
    %v354 = vld [vmem:[#allocation8 + $0x48] sm:$0xff]
    %v355 = vld [vmem:[#allocation8 + $0x50] sm:$0xff]
    %v356 = vld [vmem:[#allocation8 + $0x58] sm:$0xff]
    %v357 = vld [vmem:[#allocation8 + $0x60] sm:$0xff]
    %v358 = vld [vmem:[#allocation8 + $0x68] sm:$0xff]
    %v359 = vld [vmem:[#allocation8 + $0x70] sm:$0xff]
    %v360 = vld [vmem:[#allocation8 + $0x78] sm:$0xff]
    %v361 = vld [vmem:[%s6] sm:$0x1]
    %v363 = vlaneseq
    %v364 = vshrl.u32 %v363, 7
    %v365 = vsub.s32 0, %v364
    %v366 = vrot.slane %v361, %v365
    %368 = vmatprep.subr.mxu0 0.0
    %369 = vmatpush1.msra.mxu0 %v360
    %370 = vmatprep.subr.mxu0 0.0
    %371 = vmatpush1.msra.mxu0 %v359
    %372 = vmatprep.subr.mxu0 0.0
    %373 = vmatpush1.msra.mxu0 %v358
    %374 = vmatprep.subr.mxu0 0.0
    %375 = vmatpush1.msra.mxu0 %v357
    %376 = vmatprep.subr.mxu0 0.0
    %377 = vmatpush1.msra.mxu0 %v356
    %378 = vmatprep.subr.mxu0 0.0
    %379 = vmatpush1.msra.mxu0 %v355
    %380 = vmatprep.subr.mxu0 0.0
    %381 = vmatpush1.msra.mxu0 %v354
    %382 = vmatprep.subr.mxu0 0.0
    %383 = vmatpush1.msra.mxu0 %v353
    %384 = vmatprep.subr.mxu0 0.0
    %385 = vmatpush1.msra.mxu0 %v352
    %386 = vmatprep.subr.mxu0 0.0
    %387 = vmatpush1.msra.mxu0 %v351
    %388 = vmatprep.subr.mxu0 0.0
    %389 = vmatpush1.msra.mxu0 %v350
    %390 = vmatprep.subr.mxu0 0.0
    %391 = vmatpush1.msra.mxu0 %v349
    %392 = vmatprep.subr.mxu0 0.0
    %393 = vmatpush1.msra.mxu0 %v348
    %394 = vmatprep.subr.mxu0 0.0
    %395 = vmatpush1.msra.mxu0 %v347
    %396 = vmatprep.subr.mxu0 0.0
    %397 = vmatpush1.msra.mxu0 %v346
    %398 = vmatprep.subr.mxu0 0.0
    %399 = vmatpush1.msra.mxu0 %v345
    %400 = vmatprep.subr.mxu0 0.0
    %401 = vmatpush2.msra.mxu0 0.0
    %402 = vmatprep.subr.mxu0 0.0
    %403 = vmatpush2.msra.mxu0 0.0
    %404 = vmatprep.subr.mxu0 0.0
    %405 = vmatpush2.msra.mxu0 0.0
    %406 = vmatprep.subr.mxu0 0.0
    %407 = vmatpush2.msra.mxu0 0.0
    %408 = vmatprep.subr.mxu0 0.0
    %409 = vmatpush2.msra.mxu0 0.0
    %410 = vmatprep.subr.mxu0 0.0
    %411 = vmatpush2.msra.mxu0 0.0
    %412 = vmatprep.subr.mxu0 0.0
    %413 = vmatpush2.msra.mxu0 0.0
    %414 = vmatprep.subr.mxu0 0.0
    %415 = vmatpush2.msra.mxu0 0.0
    %416 = vmatprep.subr.mxu0 0.0
    %417 = vmatpush2.msra.mxu0 0.0
    %418 = vmatprep.subr.mxu0 0.0
    %419 = vmatpush2.msra.mxu0 0.0
    %420 = vmatprep.subr.mxu0 0.0
    %421 = vmatpush2.msra.mxu0 0.0
    %422 = vmatprep.subr.mxu0 0.0
    %423 = vmatpush2.msra.mxu0 0.0
    %424 = vmatprep.subr.mxu0 0.0
    %425 = vmatpush2.msra.mxu0 0.0
    %426 = vmatprep.subr.mxu0 0.0
    %427 = vmatpush2.msra.mxu0 0.0
    %428 = vmatprep.subr.mxu0 0.0
    %429 = vmatpush2.msra.mxu0 0.0
    %430 = vmatprep.subr.mxu0 0.0
    %431 = vmatpush2.msra.mxu0 0.0
    %432 = vmatprep.mubr.f32.mxu0 0.0
    %433 = vmatmul.mubr.f32.gmra.mxu0 %v343
    %v434 = vpop.f32.mrf.mxu0
    %v435 = vadd.f32 %v366, %v434
    %v436 = vpop.f32.mrf.mxu0
    %437 = vmatprep.mubr.f32.mxu0 0.0
    %438 = vmatmul.mubr.f32.gmra.mxu0 %v344
    %v439 = vpop.f32.mrf.mxu0
    %v440 = vadd.f32 %v366, %v439
    %v441 = vpop.f32.mrf.mxu0
    %442 = vdwg.mxu0
    %v443 = vmax.f32 %v435, 0.0
    %v444 = vmax.f32 %v440, 0.0
    %445 = vst [vmem:[#allocation14] sm:$0xff] %v443
    %446 = vst [vmem:[#allocation14 + $0x8] sm:$0xff] %v444
    %v447 = vld [vmem:[#allocation10] sm:$0xff]
    %v448 = vld [vmem:[#allocation10 + $0x8] sm:$0xff]
    %v449 = vld [vmem:[#allocation10 + $0x10] sm:$0xff]
    %v450 = vld [vmem:[#allocation10 + $0x18] sm:$0xff]
    %v451 = vld [vmem:[#allocation10 + $0x20] sm:$0xff]
    %v452 = vld [vmem:[#allocation10 + $0x28] sm:$0xff]
    %v453 = vld [vmem:[#allocation10 + $0x30] sm:$0xff]
    %v454 = vld [vmem:[#allocation10 + $0x38] sm:$0xff]
    %v455 = vld [vmem:[#allocation10 + $0x40] sm:$0xff]
    %v456 = vld [vmem:[#allocation10 + $0x48] sm:$0xff]
    %v457 = vld [vmem:[#allocation10 + $0x50] sm:$0xff]
    %v458 = vld [vmem:[#allocation10 + $0x58] sm:$0xff]
    %v459 = vld [vmem:[#allocation10 + $0x60] sm:$0xff]
    %v460 = vld [vmem:[#allocation10 + $0x68] sm:$0xff]
    %v461 = vld [vmem:[#allocation10 + $0x70] sm:$0xff]
    %v462 = vld [vmem:[#allocation10 + $0x78] sm:$0xff]
    %v463 = vld [vmem:[%s8] sm:$0x1]
    %v465 = vlaneseq
    %v466 = vshrl.u32 %v465, 7
    %v467 = vsub.s32 0, %v466
    %v468 = vrot.slane %v463, %v467
    %470 = vmatprep.subr.mxu0 0.0
    %471 = vmatpush1.msra.mxu0 %v462
    %472 = vmatprep.subr.mxu0 0.0
    %473 = vmatpush1.msra.mxu0 %v461
    %474 = vmatprep.subr.mxu0 0.0
    %475 = vmatpush1.msra.mxu0 %v460
    %476 = vmatprep.subr.mxu0 0.0
    %477 = vmatpush1.msra.mxu0 %v459
    %478 = vmatprep.subr.mxu0 0.0
    %479 = vmatpush1.msra.mxu0 %v458
    %480 = vmatprep.subr.mxu0 0.0
    %481 = vmatpush1.msra.mxu0 %v457
    %482 = vmatprep.subr.mxu0 0.0
    %483 = vmatpush1.msra.mxu0 %v456
    %484 = vmatprep.subr.mxu0 0.0
    %485 = vmatpush1.msra.mxu0 %v455
    %486 = vmatprep.subr.mxu0 0.0
    %487 = vmatpush1.msra.mxu0 %v454
    %488 = vmatprep.subr.mxu0 0.0
    %489 = vmatpush1.msra.mxu0 %v453
    %490 = vmatprep.subr.mxu0 0.0
    %491 = vmatpush1.msra.mxu0 %v452
    %492 = vmatprep.subr.mxu0 0.0
    %493 = vmatpush1.msra.mxu0 %v451
    %494 = vmatprep.subr.mxu0 0.0
    %495 = vmatpush1.msra.mxu0 %v450
    %496 = vmatprep.subr.mxu0 0.0
    %497 = vmatpush1.msra.mxu0 %v449
    %498 = vmatprep.subr.mxu0 0.0
    %499 = vmatpush1.msra.mxu0 %v448
    %500 = vmatprep.subr.mxu0 0.0
    %501 = vmatpush1.msra.mxu0 %v447
    %502 = vmatprep.subr.mxu0 0.0
    %503 = vmatpush2.msra.mxu0 0.0
    %504 = vmatprep.subr.mxu0 0.0
    %505 = vmatpush2.msra.mxu0 0.0
    %506 = vmatprep.subr.mxu0 0.0
    %507 = vmatpush2.msra.mxu0 0.0
    %508 = vmatprep.subr.mxu0 0.0
    %509 = vmatpush2.msra.mxu0 0.0
    %510 = vmatprep.subr.mxu0 0.0
    %511 = vmatpush2.msra.mxu0 0.0
    %512 = vmatprep.subr.mxu0 0.0
    %513 = vmatpush2.msra.mxu0 0.0
    %514 = vmatprep.subr.mxu0 0.0
    %515 = vmatpush2.msra.mxu0 0.0
    %516 = vmatprep.subr.mxu0 0.0
    %517 = vmatpush2.msra.mxu0 0.0
    %518 = vmatprep.subr.mxu0 0.0
    %519 = vmatpush2.msra.mxu0 0.0
    %520 = vmatprep.subr.mxu0 0.0
    %521 = vmatpush2.msra.mxu0 0.0
    %522 = vmatprep.subr.mxu0 0.0
    %523 = vmatpush2.msra.mxu0 0.0
    %524 = vmatprep.subr.mxu0 0.0
    %525 = vmatpush2.msra.mxu0 0.0
    %526 = vmatprep.subr.mxu0 0.0
    %527 = vmatpush2.msra.mxu0 0.0
    %528 = vmatprep.subr.mxu0 0.0
    %529 = vmatpush2.msra.mxu0 0.0
    %530 = vmatprep.subr.mxu0 0.0
    %531 = vmatpush2.msra.mxu0 0.0
    %532 = vmatprep.subr.mxu0 0.0
    %533 = vmatpush2.msra.mxu0 0.0
    %534 = vmatprep.mubr.f32.mxu0 0.0
    %535 = vmatmul.mubr.f32.gmra.mxu0 %v443
    %v536 = vpop.f32.mrf.mxu0
    %v537 = vadd.f32 %v468, %v536
    %v538 = vpop.f32.mrf.mxu0
    %539 = vmatprep.mubr.f32.mxu0 0.0
    %540 = vmatmul.mubr.f32.gmra.mxu0 %v444
    %v541 = vpop.f32.mrf.mxu0
    %v542 = vadd.f32 %v468, %v541
    %v543 = vpop.f32.mrf.mxu0
    %544 = vdwg.mxu0
    %v545 = vmax.f32 %v537, 0.0
    %v546 = vmax.f32 %v542, 0.0
    %v547 = vld [vmem:[#allocation11] sm:$0xff]
    %v548 = vld [vmem:[#allocation11 + $0x8] sm:$0xff]
    %v549 = vld [vmem:[#allocation11 + $0x10] sm:$0xff]
    %v550 = vld [vmem:[#allocation11 + $0x18] sm:$0xff]
    %v551 = vld [vmem:[#allocation11 + $0x20] sm:$0xff]
    %v552 = vld [vmem:[#allocation11 + $0x28] sm:$0xff]
    %v553 = vld [vmem:[#allocation11 + $0x30] sm:$0xff]
    %v554 = vld [vmem:[#allocation11 + $0x38] sm:$0xff]
    %v555 = vld [vmem:[#allocation11 + $0x40] sm:$0xff]
    %v556 = vld [vmem:[#allocation11 + $0x48] sm:$0xff]
    %v557 = vld [vmem:[#allocation11 + $0x50] sm:$0xff]
    %v558 = vld [vmem:[#allocation11 + $0x58] sm:$0xff]
    %v559 = vld [vmem:[#allocation11 + $0x60] sm:$0xff]
    %v560 = vld [vmem:[#allocation11 + $0x68] sm:$0xff]
    %v561 = vld [vmem:[#allocation11 + $0x70] sm:$0xff]
    %v562 = vld [vmem:[#allocation11 + $0x78] sm:$0xff]
    %v563 = vld [vmem:[%s10] sm:$0x1]
    %v565 = vlaneseq
    %v566 = vshrl.u32 %v565, 7
    %v567 = vsub.s32 0, %v566
    %v568 = vrot.slane %v563, %v567
    %570 = vmatprep.subr.mxu0 0.0
    %571 = vmatpush1.msra.mxu0 %v562
    %572 = vmatprep.subr.mxu0 0.0
    %573 = vmatpush1.msra.mxu0 %v561
    %574 = vmatprep.subr.mxu0 0.0
    %575 = vmatpush1.msra.mxu0 %v560
    %576 = vmatprep.subr.mxu0 0.0
    %577 = vmatpush1.msra.mxu0 %v559
    %578 = vmatprep.subr.mxu0 0.0
    %579 = vmatpush1.msra.mxu0 %v558
    %580 = vmatprep.subr.mxu0 0.0
    %581 = vmatpush1.msra.mxu0 %v557
    %582 = vmatprep.subr.mxu0 0.0
    %583 = vmatpush1.msra.mxu0 %v556
    %584 = vmatprep.subr.mxu0 0.0
    %585 = vmatpush1.msra.mxu0 %v555
    %586 = vmatprep.subr.mxu0 0.0
    %587 = vmatpush1.msra.mxu0 %v554
    %588 = vmatprep.subr.mxu0 0.0
    %589 = vmatpush1.msra.mxu0 %v553
    %590 = vmatprep.subr.mxu0 0.0
    %591 = vmatpush1.msra.mxu0 %v552
    %592 = vmatprep.subr.mxu0 0.0
    %593 = vmatpush1.msra.mxu0 %v551
    %594 = vmatprep.subr.mxu0 0.0
    %595 = vmatpush1.msra.mxu0 %v550
    %596 = vmatprep.subr.mxu0 0.0
    %597 = vmatpush1.msra.mxu0 %v549
    %598 = vmatprep.subr.mxu0 0.0
    %599 = vmatpush1.msra.mxu0 %v548
    %600 = vmatprep.subr.mxu0 0.0
    %601 = vmatpush1.msra.mxu0 %v547
    %602 = vmatprep.subr.mxu0 0.0
    %603 = vmatpush2.msra.mxu0 0.0
    %604 = vmatprep.subr.mxu0 0.0
    %605 = vmatpush2.msra.mxu0 0.0
    %606 = vmatprep.subr.mxu0 0.0
    %607 = vmatpush2.msra.mxu0 0.0
    %608 = vmatprep.subr.mxu0 0.0
    %609 = vmatpush2.msra.mxu0 0.0
    %610 = vmatprep.subr.mxu0 0.0
    %611 = vmatpush2.msra.mxu0 0.0
    %612 = vmatprep.subr.mxu0 0.0
    %613 = vmatpush2.msra.mxu0 0.0
    %614 = vmatprep.subr.mxu0 0.0
    %615 = vmatpush2.msra.mxu0 0.0
    %616 = vmatprep.subr.mxu0 0.0
    %617 = vmatpush2.msra.mxu0 0.0
    %618 = vmatprep.subr.mxu0 0.0
    %619 = vmatpush2.msra.mxu0 0.0
    %620 = vmatprep.subr.mxu0 0.0
    %621 = vmatpush2.msra.mxu0 0.0
    %622 = vmatprep.subr.mxu0 0.0
    %623 = vmatpush2.msra.mxu0 0.0
    %624 = vmatprep.subr.mxu0 0.0
    %625 = vmatpush2.msra.mxu0 0.0
    %626 = vmatprep.subr.mxu0 0.0
    %627 = vmatpush2.msra.mxu0 0.0
    %628 = vmatprep.subr.mxu0 0.0
    %629 = vmatpush2.msra.mxu0 0.0
    %630 = vmatprep.subr.mxu0 0.0
    %631 = vmatpush2.msra.mxu0 0.0
    %632 = vmatprep.subr.mxu0 0.0
    %633 = vmatpush2.msra.mxu0 0.0
    %634 = vmatprep.mubr.f32.mxu0 0.0
    %635 = vmatmul.mubr.f32.gmra.mxu0 %v545
    %v636 = vpop.f32.mrf.mxu0
    %v637 = vadd.f32 %v568, %v636
    %v638 = vpop.f32.mrf.mxu0
    %639 = vmatprep.mubr.f32.mxu0 0.0
    %640 = vmatmul.mubr.f32.gmra.mxu0 %v546
    %v641 = vpop.f32.mrf.mxu0
    %v642 = vadd.f32 %v568, %v641
    %v643 = vpop.f32.mrf.mxu0
    %644 = vdwg.mxu0
    %v645 = vmax.f32 %v637, 0.0
    %v646 = vmax.f32 %v642, 0.0
    %v647 = vld [vmem:[#allocation13] sm:$0xff]
    %v648 = vld [vmem:[#allocation13 + $0x8] sm:$0xff]
    %v649 = vld [vmem:[#allocation13 + $0x10] sm:$0xff]
    %v650 = vld [vmem:[#allocation13 + $0x18] sm:$0xff]
    %v651 = vld [vmem:[#allocation13 + $0x20] sm:$0xff]
    %v652 = vld [vmem:[#allocation13 + $0x28] sm:$0xff]
    %v653 = vld [vmem:[#allocation13 + $0x30] sm:$0xff]
    %v654 = vld [vmem:[#allocation13 + $0x38] sm:$0xff]
    %v655 = vld [vmem:[#allocation13 + $0x40] sm:$0xff]
    %v656 = vld [vmem:[#allocation13 + $0x48] sm:$0xff]
    %v657 = vld [vmem:[#allocation13 + $0x50] sm:$0xff]
    %v658 = vld [vmem:[#allocation13 + $0x58] sm:$0xff]
    %v659 = vld [vmem:[#allocation13 + $0x60] sm:$0xff]
    %v660 = vld [vmem:[#allocation13 + $0x68] sm:$0xff]
    %v661 = vld [vmem:[#allocation13 + $0x70] sm:$0xff]
    %v662 = vld [vmem:[#allocation13 + $0x78] sm:$0xff]
    %v663 = vld [vmem:[%s12] sm:$0x1]
    %v665 = vlaneseq
    %v666 = vshrl.u32 %v665, 7
    %v667 = vsub.s32 0, %v666
    %v668 = vrot.slane %v663, %v667
    %670 = vmatprep.subr.mxu0 0.0
    %671 = vmatpush1.msra.mxu0 %v662
    %672 = vmatprep.subr.mxu0 0.0
    %673 = vmatpush1.msra.mxu0 %v661
    %674 = vmatprep.subr.mxu0 0.0
    %675 = vmatpush1.msra.mxu0 %v660
    %676 = vmatprep.subr.mxu0 0.0
    %677 = vmatpush1.msra.mxu0 %v659
    %678 = vmatprep.subr.mxu0 0.0
    %679 = vmatpush1.msra.mxu0 %v658
    %680 = vmatprep.subr.mxu0 0.0
    %681 = vmatpush1.msra.mxu0 %v657
    %682 = vmatprep.subr.mxu0 0.0
    %683 = vmatpush1.msra.mxu0 %v656
    %684 = vmatprep.subr.mxu0 0.0
    %685 = vmatpush1.msra.mxu0 %v655
    %686 = vmatprep.subr.mxu0 0.0
    %687 = vmatpush1.msra.mxu0 %v654
    %688 = vmatprep.subr.mxu0 0.0
    %689 = vmatpush1.msra.mxu0 %v653
    %690 = vmatprep.subr.mxu0 0.0
    %691 = vmatpush1.msra.mxu0 %v652
    %692 = vmatprep.subr.mxu0 0.0
    %693 = vmatpush1.msra.mxu0 %v651
    %694 = vmatprep.subr.mxu0 0.0
    %695 = vmatpush1.msra.mxu0 %v650
    %696 = vmatprep.subr.mxu0 0.0
    %697 = vmatpush1.msra.mxu0 %v649
    %698 = vmatprep.subr.mxu0 0.0
    %699 = vmatpush1.msra.mxu0 %v648
    %700 = vmatprep.subr.mxu0 0.0
    %701 = vmatpush1.msra.mxu0 %v647
    %702 = vmatprep.subr.mxu0 0.0
    %703 = vmatpush2.msra.mxu0 0.0
    %704 = vmatprep.subr.mxu0 0.0
    %705 = vmatpush2.msra.mxu0 0.0
    %706 = vmatprep.subr.mxu0 0.0
    %707 = vmatpush2.msra.mxu0 0.0
    %708 = vmatprep.subr.mxu0 0.0
    %709 = vmatpush2.msra.mxu0 0.0
    %710 = vmatprep.subr.mxu0 0.0
    %711 = vmatpush2.msra.mxu0 0.0
    %712 = vmatprep.subr.mxu0 0.0
    %713 = vmatpush2.msra.mxu0 0.0
    %714 = vmatprep.subr.mxu0 0.0
    %715 = vmatpush2.msra.mxu0 0.0
    %716 = vmatprep.subr.mxu0 0.0
    %717 = vmatpush2.msra.mxu0 0.0
    %718 = vmatprep.subr.mxu0 0.0
    %719 = vmatpush2.msra.mxu0 0.0
    %720 = vmatprep.subr.mxu0 0.0
    %721 = vmatpush2.msra.mxu0 0.0
    %722 = vmatprep.subr.mxu0 0.0
    %723 = vmatpush2.msra.mxu0 0.0
    %724 = vmatprep.subr.mxu0 0.0
    %725 = vmatpush2.msra.mxu0 0.0
    %726 = vmatprep.subr.mxu0 0.0
    %727 = vmatpush2.msra.mxu0 0.0
    %728 = vmatprep.subr.mxu0 0.0
    %729 = vmatpush2.msra.mxu0 0.0
    %730 = vmatprep.subr.mxu0 0.0
    %731 = vmatpush2.msra.mxu0 0.0
    %732 = vmatprep.subr.mxu0 0.0
    %733 = vmatpush2.msra.mxu0 0.0
    %734 = vmatprep.mubr.f32.mxu0 0.0
    %735 = vmatmul.mubr.f32.gmra.mxu0 %v645
    %v736 = vpop.f32.mrf.mxu0
    %v737 = vadd.f32 %v668, %v736
    %v738 = vpop.f32.mrf.mxu0
    %739 = vmatprep.mubr.f32.mxu0 0.0
    %740 = vmatmul.mubr.f32.gmra.mxu0 %v646
    %v741 = vpop.f32.mrf.mxu0
    %v742 = vadd.f32 %v668, %v741
    %v743 = vpop.f32.mrf.mxu0
    %744 = vdwg.mxu0
    %745 = vst [vmem:[#allocation15] sm:$0xff] %v737
    %746 = vst [vmem:[#allocation15 + $0x8] sm:$0xff] %v742
    // Predicated region
    $region82: #{tpu_custom_call.1} parent=1 // pred_check
      _
    $region83: #{tpu_custom_call.1} parent=1 // pred_check_branch
      %748 = sbr.rel (0) target = $region85
    $region84: #{tpu_custom_call.1} parent=1 // pred_region
      %s750 = ssub.s32 256, 256
      %751 = vsyncadd [#allocation4], %s750
      %s752 = sshll.u32 [#allocation14], 4
      %s753 = int_to_ptr.vmem [resolvable:$true] %s752
      %758 = dma.vmem_to_hbm [thread:$0]  %s753, 256, %s13, [#allocation4], 128, 128, 8
    $region85: #{tpu_custom_call.1} parent=1 // pred_fallthru
      _
    // Predicated region
    $region86: #{tpu_custom_call.1} parent=1 // pred_check
      _
    $region87: #{tpu_custom_call.1} parent=1 // pred_check_branch
      %760 = sbr.rel (0) target = $region89
    $region88: #{tpu_custom_call.1} parent=1 // pred_region
      %s762 = ssub.s32 256, 256
      %763 = vsyncadd [#allocation16], %s762
      %s764 = sshll.u32 [#allocation15], 4
      %s765 = int_to_ptr.vmem [resolvable:$true] %s764
      %770 = dma.vmem_to_hbm [thread:$0]  %s765, 256, %s14, [#allocation16], 128, 128, 8
    $region89: #{tpu_custom_call.1} parent=1 // pred_fallthru
      _
    // Predicated region
    $region90: #{tpu_custom_call.1} parent=1 // pred_check
      _
    $region91: #{tpu_custom_call.1} parent=1 // pred_check_branch
      %772 = sbr.rel (0) target = $region93
    $region92: #{tpu_custom_call.1} parent=1 // pred_region
      %773 = dma.done [#allocation4], 256
    $region93: #{tpu_custom_call.1} parent=1 // pred_fallthru
      _
    // Predicated region
    $region94: #{tpu_custom_call.1} parent=1 // pred_check
      _
    $region95: #{tpu_custom_call.1} parent=1 // pred_check_branch
      %775 = sbr.rel (0) target = $region97
    $region96: #{tpu_custom_call.1} parent=1 // pred_region
      %776 = dma.done [#allocation16], 256
    $region97: #{tpu_custom_call.1} parent=1 // pred_fallthru
      _
    %777 = vsyncpa [#allocation3], 1
    %778 = vsyncpa [#allocation6], 1
    %779 = vsyncpa [#allocation9], 1
    %780 = vsyncpa [#allocation12], 1
    %781 = vsyncpa [#allocation4], 1
    %782 = vsyncpa [#allocation16], 1

</llo_original>
